<compile_context>
chip_gen: v5e
topology: v5e:2x2
jax: 0.10.0
libtpu: 0.0.40
codegen_flags: <defaults>
</compile_context>

<pallas_src>
import jax
import jax.numpy as jnp
from jax.experimental import pallas as pl
from jax.experimental.pallas import tpu as pltpu


def _chomp_copy_kernel(x_ref, o_ref):
    # Pure tile copy.  When the input tile is wider than the output tile
    # (ragged full-width path) the static prefix slice drops exactly the
    # chomped tail; otherwise the slice is the whole ref.
    o_ref[...] = x_ref[:, : o_ref.shape[-1]]


def _vmem_capacity_bytes() -> int:
    """Physical VMEM per TensorCore; conservative fallback if unavailable."""
    try:
        cap = getattr(pltpu.get_tpu_info(), "vmem_capacity_bytes", None)
        if cap:
            return int(cap)
    except Exception:
        pass
    return 64 * 1024 * 1024  # v7x-sized fallback: safe on every generation


def chomp1d(x: jax.Array, chomp_size: int) -> jax.Array:
    """Pallas implementation of Chomp1d.forward for x of shape (N, C, L)."""
    n, c, l = x.shape
    chomp_size = int(chomp_size)
    l_out = l - chomp_size
    assert 0 < l_out <= l, "chomp_size must be in [0, L)"
    if chomp_size == 0:
        return x

    # Small-L path: an output last dim < 128 lanes would force masked partial
    # stores on every tile (the largest measured perf lever); at these sizes a
    # Pallas launch loses to XLA's own slice/copy.
    if l_out < 128:
        return x[:, :, :l_out]

    rows = n * c
    x2 = x.reshape(rows, l)  # free view: the chomp only touches the last dim
    itemsize = jnp.dtype(x.dtype).itemsize
    sub = 32  # universal sublane granularity (legal for f32 / bf16 / int8)

    # ---- generation-aware VMEM budget ---------------------------------------
    # ~4 tiles live at once (double-buffered input + double-buffered output).
    vmem_cap = _vmem_capacity_bytes()           # 128 MiB (v5e/v6e), 64 MiB (v7x)
    scoped_budget = min(vmem_cap * 3 // 4, 64 * 1024 * 1024)  # 64 MiB / 48 MiB
    tile_budget = scoped_budget // 6            # headroom for 4 live tiles

    # ---- column (lane) tiling ------------------------------------------------
    # Widest column tile that still fits `sub` rows inside the tile budget.
    max_cols = max(128, ((tile_budget // (sub * itemsize)) // 128) * 128)

    if l_out % 128 == 0 and l_out <= max_cols:
        # Full-width, contiguous output stripe; in/out share the window so the
        # chomped tail is never read from HBM.
        tl, tl_in = l_out, l_out
    elif l_out % 128 != 0 and chomp_size * 8 <= l and l <= max_cols:
        # Ragged l_out with small chomp: output block = full output dim
        # (legal + contiguous writeback), input block = full input dim
        # (<= 12.5% tail over-read).
        tl, tl_in = l_out, l
    else:
        # Multiple-of-128 column tiles with identical in/out windows (no tail
        # read); at most one ragged edge stripe uses masked stores.
        tl = min(max_cols, (l_out // 128) * 128)
        tl_in = tl

    # ---- row (sublane) tiling ------------------------------------------------
    if rows * tl_in * itemsize <= tile_budget or rows <= sub:
        tr = rows  # full dim: always layout-legal for any dtype
    else:
        tr = max(sub, ((tile_budget // (tl_in * itemsize)) // sub) * sub)

    # Megacore (v7x has 2 TensorCores): guarantee >= 2 blocks along a
    # "parallel" axis so both cores drive DMA queues.
    if rows > sub and pl.cdiv(rows, tr) == 1 and pl.cdiv(l_out, tl) == 1:
        tr = max(sub, ((((rows + 1) // 2) + sub - 1) // sub) * sub)

    grid = (pl.cdiv(rows, tr), pl.cdiv(l_out, tl))

    out2 = pl.pallas_call(
        _chomp_copy_kernel,
        out_shape=jax.ShapeDtypeStruct((rows, l_out), x.dtype),
        grid_spec=pltpu.PrefetchScalarGridSpec(
            num_scalar_prefetch=0,
            grid=grid,
            in_specs=[pl.BlockSpec((tr, tl_in), lambda i, j: (i, j))],
            out_specs=pl.BlockSpec((tr, tl), lambda i, j: (i, j)),
        ),
        compiler_params=pltpu.CompilerParams(
            dimension_semantics=("parallel", "parallel"),
            vmem_limit_bytes=int(scoped_budget),
        ),
        cost_estimate=pl.CostEstimate(
            flops=0,
            transcendentals=0,
            bytes_accessed=2 * rows * l_out * itemsize,
        ),
    )(x2)

    return out2.reshape(n, c, l_out)

    # TODO(synk): in a real TCN, fuse the chomp into the producing conv's
    # output BlockSpec instead of materializing + re-copying the activation.


class Chomp1d:
    """Thin wrapper mirroring the PyTorch module interface."""

    def __init__(self, chomp_size: int):
        self.chomp_size = int(chomp_size)

    def __call__(self, x: jax.Array) -> jax.Array:
        return chomp1d(x, self.chomp_size)


if __name__ == "__main__":
    keys = jax.random.split(jax.random.PRNGKey(0), 5)

    # Case 1: tiny TCN-like shape (l_out < 128 -> XLA slice dispatch).
    x1 = jax.random.normal(keys[0], (2, 4, 16), dtype=jnp.float32)
    o1 = jax.block_until_ready(Chomp1d(4)(x1))
    r1 = x1[:, :, :12]
    assert o1.shape == r1.shape and o1.dtype == x1.dtype
    assert jnp.array_equal(o1, r1), "case 1 mismatch"

    # Case 2: lane-dense path, l_out a multiple of 128, bf16, single tile.
    x2 = jax.random.normal(keys[1], (2, 8, 272), dtype=jnp.bfloat16)
    o2 = jax.block_until_ready(Chomp1d(16)(x2))
    r2 = x2[:, :, :256]
    assert o2.shape == r2.shape and o2.dtype == x2.dtype
    assert jnp.array_equal(o2, r2), "case 2 mismatch"

    # Case 3: ragged l_out with small chomp -> full-width contiguous output
    # block, full-row input block (tiny tail over-read).
    x3 = jax.random.normal(keys[2], (2, 8, 200), dtype=jnp.float32)
    o3 = jax.block_until_ready(Chomp1d(5)(x3))
    r3 = x3[:, :, :195]
    assert o3.shape == r3.shape and o3.dtype == x3.dtype
    assert jnp.array_equal(o3, r3), "case 3 mismatch"

    # Case 4: larger slab -> single-tile grid would collapse to (1,1); row
    # split kicks in so two parallel blocks exist (megacore on v7x).
    x4 = jax.random.normal(keys[3], (4, 96, 640), dtype=jnp.float32)
    o4 = jax.block_until_ready(Chomp1d(128)(x4))
    r4 = x4[:, :, :512]
    assert o4.shape == r4.shape and o4.dtype == x4.dtype
    assert jnp.array_equal(o4, r4), "case 4 mismatch"

    # Case 5: ragged l_out with a large chomp -> multiple-of-128 column tiles
    # sharing in/out windows (chomped tail never read), masked edge stripe.
    x5 = jax.random.normal(keys[4], (2, 16, 1000), dtype=jnp.float32)
    o5 = jax.block_until_ready(Chomp1d(500)(x5))
    r5 = x5[:, :, :500]
    assert o5.shape == r5.shape and o5.dtype == x5.dtype
    assert jnp.array_equal(o5, r5), "case 5 mismatch"

    print("KERNEL_OK")
</pallas_src>

<mosaic_0001>
module attributes {stable_mosaic.version = 11 : i64} {
  func.func @_chomp_copy_kernel(%arg0: i32, %arg1: i32, %arg2: memref<16x256xbf16, #tpu.memory_space<vmem>>, %arg3: memref<16x256xbf16, #tpu.memory_space<vmem>>) attributes {dimension_semantics = [#tpu.dimension_semantics<parallel>, #tpu.dimension_semantics<parallel>], iteration_bounds = array<i64: 1, 1>, scalar_prefetch = 0 : i64, scratch_operands = 0 : i64, tpu.core_type = #tpu.core_type<tc>, window_params = [{transform_indices = @transform_0, window_bounds = array<i64: 16, 256>}, {transform_indices = @transform_1, window_bounds = array<i64: 16, 256>}]} {
    %c0 = arith.constant 0 : index
    %c0_0 = arith.constant 0 : index
    %0 = vector.load %arg2[%c0, %c0_0] : memref<16x256xbf16, #tpu.memory_space<vmem>>, vector<16x256xbf16>
    %c0_1 = arith.constant 0 : index
    %c0_2 = arith.constant 0 : index
    %1 = vector.load %arg3[%c0_1, %c0_2] : memref<16x256xbf16, #tpu.memory_space<vmem>>, vector<16x256xbf16>
    tpu.vector_store %arg3[%c0_1, %c0_2], %0 {strides = array<i32>} : memref<16x256xbf16, #tpu.memory_space<vmem>>, vector<16x256xbf16>,
    return
  }
  func.func @transform_0(%arg0: i32, %arg1: i32) -> (i32, i32) {
    %c0_i32 = arith.constant 0 : i32
    return %arg0, %arg1 : i32, i32
  }
  func.func @transform_1(%arg0: i32, %arg1: i32) -> (i32, i32) {
    %c0_i32 = arith.constant 0 : i32
    return %arg0, %arg1 : i32, i32
  }
}

</mosaic_0001>

<llo_original>
// kernel: tpu_custom_call.1
$region0: #{tpu_custom_call.1}
  #allocation0 [shape = 'u32[]', space=smem, size = 0x4, offset = 0x4, fixed_abs, tag = 'smem constant byte address 0x4 - core index']
  #allocation1 [shape = 'u32[72,128]{1,0:T(1,128)}', space=vmem, size = 0x9000, scoped, tag = 'internal scratch']
  %s0 = inlined_call_operand.hbm [shape: bf16[16,272], index: 0, kind: input, shape index: {}]
  %s1 = inlined_call_operand.hbm [shape: bf16[16,256], index: 1, kind: output, shape index: {}]
  %s2 = sld [smem:[#allocation0]]
  $region18: #{tpu_custom_call.1} parent=0
    _
  %s4 = ssub.s32 1, %s2
  %s5 = scalar_select 0, %s4, %s2
  $region1: #{tpu_custom_call.1} parent=0
    #allocation2 [shape = 'u8[8192]{0}', space=vmem, size = 0x2000, scoped, tag = 'input window, operand 0, single buffered']
    #allocation3 [shape = 's32[1]{0}', space=sflag, size = 0x4, scoped, tag = 'scoped memory for tpu_custom_call.1']
    #allocation4 [shape = 's32[1]{0}', space=sflag, size = 0x4, scoped, tag = 'scoped memory for tpu_custom_call.1']
    #allocation5 [shape = 'u8[8192]{0}', space=vmem, size = 0x2000, scoped, tag = 'output window, operand 0, single buffered']
    %6 = vsyncpa [#allocation3], 0
    %7 = vsyncpa [#allocation4], 0
    // Predicated region
    $region2: #{tpu_custom_call.1} parent=1 // pred_check
      _
    $region3: #{tpu_custom_call.1} parent=1 // pred_check_branch
      %9 = sbr.rel (0) target = $region5
    $region4: #{tpu_custom_call.1} parent=1 // pred_region
      %11 = vsyncadd [#allocation3], 0
      %s12 = sshll.u32 %s0, 4
      %s13 = int_to_ptr.hbm [resolvable:$true] %s12
      %s14 = sshll.u32 [#allocation2], 4
      %s15 = int_to_ptr.vmem [resolvable:$true] %s14
      %20 = dma.hbm_to_vmem [thread:$0]  %s13, 256, %s15, [#allocation3], 192, 128, 8
    $region5: #{tpu_custom_call.1} parent=1 // pred_fallthru
      _
    // Predicated region
    $region6: #{tpu_custom_call.1} parent=1 // pred_check
      _
    $region7: #{tpu_custom_call.1} parent=1 // pred_check_branch
      %22 = sbr.rel (0) target = $region9
    $region8: #{tpu_custom_call.1} parent=1 // pred_region
      %24 = dma.done [#allocation3], 256
    $region9: #{tpu_custom_call.1} parent=1 // pred_fallthru
      _
    %v25 = vld [vmem:[#allocation2] sm:$0xff]
    %v26 = vld [vmem:[#allocation2 + $0x8] sm:$0xff]
    %27 = vst [vmem:[#allocation5] sm:$0xff] %v25
    %28 = vst [vmem:[#allocation5 + $0x8] sm:$0xff] %v26
    // Predicated region
    $region10: #{tpu_custom_call.1} parent=1 // pred_check
      _
    $region11: #{tpu_custom_call.1} parent=1 // pred_check_branch
      %30 = sbr.rel (0) target = $region13
    $region12: #{tpu_custom_call.1} parent=1 // pred_region
      %32 = vsyncadd [#allocation4], 0
      %s33 = sshll.u32 [#allocation5], 4
      %s34 = int_to_ptr.vmem [resolvable:$true] %s33
      %s35 = sshll.u32 %s1, 4
      %s36 = int_to_ptr.hbm [resolvable:$true] %s35
      %41 = dma.vmem_to_hbm [thread:$0]  %s34, 256, %s36, [#allocation4], 128, 128, 8
    $region13: #{tpu_custom_call.1} parent=1 // pred_fallthru
      _
    // Predicated region
    $region14: #{tpu_custom_call.1} parent=1 // pred_check
      _
    $region15: #{tpu_custom_call.1} parent=1 // pred_check_branch
      %43 = sbr.rel (0) target = $region17
    $region16: #{tpu_custom_call.1} parent=1 // pred_region
      %45 = dma.done [#allocation4], 256
    $region17: #{tpu_custom_call.1} parent=1 // pred_fallthru
      _
    %46 = vsyncpa [#allocation3], 1
    %47 = vsyncpa [#allocation4], 1

</llo_original>
